<compile_context>
chip_gen: v7x
topology: tpu7x:2x2x1
jax: 0.10.0
libtpu: 0.0.40
codegen_flags: <defaults>
</compile_context>

<pallas_src>
import functools

import jax
import jax.numpy as jnp
from jax import lax
from jax.experimental import pallas as pl
from jax.experimental.pallas import tpu as pltpu

_LOG2E = 1.4426950408889634


def _pick_tile(n, target):
    """Largest nice tile <= target that divides n, else full n."""
    for t in (target, target // 2, target // 4, 256, 128, 64, 32, 16, 8):
        if 8 <= t <= n and n % t == 0:
            return t
    return n


def _vmem_budget_and_tiles():
    """Generation-aware VMEM budget and default q/kv tile targets."""
    cap = None
    try:
        cap = getattr(pltpu.get_tpu_info(), "vmem_capacity_bytes", None)
    except Exception:  # interpret mode / non-TPU backends
        cap = None
    if cap is not None and cap >= 100 * 1024 * 1024:
        # v5e / v6e class parts: 128 MiB VMEM per TensorCore -> larger kv tiles.
        return 100 * 1024 * 1024, 512, 1024
    # v7x class (64 MiB per TC) or unknown backend: stay conservative.
    return 40 * 1024 * 1024, 256, 512


# --------------------------------------------------------------------------
# Kernel A: fused QKV projection (one matmul), tiled over (batch, seq tile).
# --------------------------------------------------------------------------
def _qkv_proj_kernel(x_ref, w_ref, q_ref, k_ref, v_ref, *, inner, cdt):
    x = x_ref[0].astype(cdt)                                   # (TS, DIM)
    qkv = jnp.dot(x, w_ref[...],
                  preferred_element_type=jnp.float32)          # (TS, 3*inner) f32
    q_ref[0] = qkv[:, :inner].astype(q_ref.dtype)
    k_ref[0] = qkv[:, inner:2 * inner].astype(k_ref.dtype)
    v_ref[0] = qkv[:, 2 * inner:].astype(v_ref.dtype)


# --------------------------------------------------------------------------
# Kernel B: flash-style attention + output projection + LayerNorm.
# grid = (batch, n_q_tiles, n_kv_tiles);  kv axis is the reduction ("arbitrary").
# Scores are in log2 space (log2(e)*scale folded into Wq) -> exp2 softmax.
# --------------------------------------------------------------------------
def _flash_attn_out_kernel(q_ref, k_ref, v_ref, wout_ref, g_ref, o_ref,
                           acc_ref, m_ref, l_ref,
                           *, heads, dim_head, eps, cdt):
    kvi = pl.program_id(2)

    @pl.when(kvi == 0)
    def _init():
        acc_ref[...] = jnp.zeros_like(acc_ref)
        m_ref[...] = jnp.full_like(m_ref, -jnp.inf)
        l_ref[...] = jnp.zeros_like(l_ref)

    q = q_ref[0]                                               # (TQ,  H*dh) cdt
    k = k_ref[0]                                               # (TKV, H*dh) cdt
    v = v_ref[0]                                               # (TKV, H*dh) cdt

    for h in range(heads):                                     # static head loop
        sl = slice(h * dim_head, (h + 1) * dim_head)
        q_h = q[:, sl]
        k_h = k[:, sl]
        v_h = v[:, sl]

        # q_h @ k_h^T with contraction over the last dims -> no XLU transpose.
        s = lax.dot_general(q_h, k_h,
                            dimension_numbers=(((1,), (1,)), ((), ())),
                            preferred_element_type=jnp.float32)  # (TQ, TKV) f32

        m_prev = m_ref[h]                                      # (TQ, 1)
        m_new = jnp.maximum(m_prev, jnp.max(s, axis=-1, keepdims=True))
        alpha = jnp.exp2(m_prev - m_new)                       # scores in log2 space
        p = jnp.exp2(s - m_new)                                # (TQ, TKV) f32

        l_ref[h] = alpha * l_ref[h] + jnp.sum(p, axis=-1, keepdims=True)
        pv = jnp.dot(p.astype(cdt), v_h,
                     preferred_element_type=jnp.float32)       # (TQ, dh) f32
        acc_ref[h] = alpha * acc_ref[h] + pv                   # full-width store
        m_ref[h] = m_new

    @pl.when(kvi == pl.num_programs(2) - 1)
    def _finalize():
        # Exact reciprocal (not approx) for parity with the reference softmax;
        # single full-width normalize over the head-major accumulator.
        norm = (acc_ref[...] / l_ref[...]).astype(cdt)         # (H, TQ, dh)

        # Output projection accumulated per head (no relayout / concat needed).
        y = jnp.dot(norm[0], wout_ref[0],
                    preferred_element_type=jnp.float32)        # (TQ, DIM) f32
        for h in range(1, heads):
            y = y + jnp.dot(norm[h], wout_ref[h],
                            preferred_element_type=jnp.float32)

        # LayerNorm (gain only, unbiased=False variance), in float32.
        mean = jnp.mean(y, axis=-1, keepdims=True)
        var = jnp.mean((y - mean) ** 2, axis=-1, keepdims=True)
        yn = (y - mean) * lax.rsqrt(var + eps) * g_ref[...]
        o_ref[0] = yn.astype(o_ref.dtype)


# --------------------------------------------------------------------------
# Wrapper
# --------------------------------------------------------------------------
def attention_forward(x, w_qkv, w_out, g, *, heads, dim_head,
                      compute_dtype=None, q_tile=None, kv_tile=None,
                      seq_tile=None):
    """x: (B, N, DIM).  Returns (B, N, DIM) in x.dtype."""
    B, N, DIM = x.shape
    inner = heads * dim_head
    assert w_qkv.shape == (DIM, 3 * inner)
    assert w_out.shape == (inner, DIM)

    # Module's LayerNorm switches eps on activation dtype.
    eps = 1e-5 if x.dtype == jnp.float32 else 1e-3
    # Default: bf16 matmul operands (f32 accumulation/softmax/LN statistics).
    cdt = jnp.bfloat16 if compute_dtype is None else jnp.dtype(compute_dtype)

    # One-time weight prep: fold query scale * log2(e) into Wq (exp2 softmax),
    # keep the fused (DIM, 3*inner) weight for a single QKV matmul, reshape Wout
    # head-major for per-head out-projection, cast weights to compute dtype.
    scale = dim_head ** (-0.5)
    w_fused = jnp.concatenate(
        [w_qkv[:, :inner] * (scale * _LOG2E), w_qkv[:, inner:]],
        axis=1).astype(cdt)                                    # (DIM, 3*inner)
    wout_h = w_out.reshape(heads, dim_head, DIM).astype(cdt)   # (H, dh, DIM)
    g2 = g.reshape(1, DIM).astype(jnp.float32)

    vmem_limit, q_tile_d, kv_tile_d = _vmem_budget_and_tiles()
    ts = _pick_tile(N, seq_tile if seq_tile is not None else 512)
    tq = _pick_tile(N, q_tile if q_tile is not None else q_tile_d)
    tkv = _pick_tile(N, kv_tile if kv_tile is not None else kv_tile_d)

    cdt_size = jnp.dtype(cdt).itemsize
    x_size = x.dtype.itemsize

    # ---------------- Kernel A: fused QKV projection ----------------
    cost_a = pl.CostEstimate(
        flops=2 * B * N * DIM * 3 * inner,
        transcendentals=0,
        bytes_accessed=(B * N * DIM * x_size
                        + DIM * 3 * inner * cdt_size
                        + 3 * B * N * inner * cdt_size))
    qkv_kernel = functools.partial(_qkv_proj_kernel, inner=inner, cdt=cdt)
    q, k, v = pl.pallas_call(
        qkv_kernel,
        out_shape=tuple(jax.ShapeDtypeStruct((B, N, inner), cdt) for _ in range(3)),
        grid_spec=pltpu.PrefetchScalarGridSpec(
            num_scalar_prefetch=0,
            grid=(B, N // ts),
            in_specs=[
                pl.BlockSpec((1, ts, DIM), lambda b, s: (b, s, 0)),
                pl.BlockSpec((DIM, 3 * inner), lambda b, s: (0, 0)),
            ],
            out_specs=[
                pl.BlockSpec((1, ts, inner), lambda b, s: (b, s, 0)),
                pl.BlockSpec((1, ts, inner), lambda b, s: (b, s, 0)),
                pl.BlockSpec((1, ts, inner), lambda b, s: (b, s, 0)),
            ],
        ),
        compiler_params=pltpu.CompilerParams(
            dimension_semantics=("parallel", "parallel"),
            vmem_limit_bytes=vmem_limit),
        cost_estimate=cost_a,
    )(x, w_fused)

    # ------- Kernel B: flash attention + out proj + LayerNorm -------
    n_q = N // tq
    cost_b = pl.CostEstimate(
        flops=4 * B * N * N * inner + 2 * B * N * inner * DIM,
        transcendentals=B * heads * N * N + B * N,
        bytes_accessed=(B * N * inner * cdt_size                 # q
                        + 2 * n_q * B * N * inner * cdt_size     # k, v (re-streamed)
                        + inner * DIM * cdt_size
                        + B * N * DIM * x_size))
    attn_kernel = functools.partial(
        _flash_attn_out_kernel, heads=heads, dim_head=dim_head, eps=eps, cdt=cdt)
    return pl.pallas_call(
        attn_kernel,
        out_shape=jax.ShapeDtypeStruct((B, N, DIM), x.dtype),
        grid_spec=pltpu.PrefetchScalarGridSpec(
            num_scalar_prefetch=0,
            grid=(B, n_q, N // tkv),
            in_specs=[
                pl.BlockSpec((1, tq, inner), lambda b, qi, ki: (b, qi, 0)),
                pl.BlockSpec((1, tkv, inner), lambda b, qi, ki: (b, ki, 0)),
                pl.BlockSpec((1, tkv, inner), lambda b, qi, ki: (b, ki, 0)),
                pl.BlockSpec((heads, dim_head, DIM), lambda b, qi, ki: (0, 0, 0)),
                pl.BlockSpec((1, DIM), lambda b, qi, ki: (0, 0)),
            ],
            out_specs=pl.BlockSpec((1, tq, DIM), lambda b, qi, ki: (b, qi, 0)),
            scratch_shapes=[
                pltpu.VMEM((heads, tq, dim_head), jnp.float32),  # acc, head-major
                pltpu.VMEM((heads, tq, 1), jnp.float32),         # running max
                pltpu.VMEM((heads, tq, 1), jnp.float32),         # running denom
            ],
        ),
        compiler_params=pltpu.CompilerParams(
            dimension_semantics=("parallel", "parallel", "arbitrary"),
            vmem_limit_bytes=vmem_limit),
        cost_estimate=cost_b,
    )(q, k, v, wout_h, g2)


# --------------------------------------------------------------------------
# Pure-JAX reference mirroring the PyTorch forward (mask/rotary = None).
# --------------------------------------------------------------------------
def _reference(x, w_qkv, w_out, g, *, heads, dim_head):
    B, N, DIM = x.shape
    inner = heads * dim_head
    scale = dim_head ** (-0.5)
    qkv = x @ w_qkv
    q, k, v = jnp.split(qkv, 3, axis=-1)

    def split_heads(t):
        return t.reshape(B, N, heads, dim_head).transpose(0, 2, 1, 3)

    q, k, v = map(split_heads, (q, k, v))
    q = q * scale
    sim = jnp.einsum('bhid,bhjd->bhij', q, k)
    attn = jax.nn.softmax(sim.astype(jnp.float32), axis=-1).astype(sim.dtype)
    out = jnp.einsum('bhij,bhjd->bhid', attn, v)
    out = out.transpose(0, 2, 1, 3).reshape(B, N, inner)
    y = out @ w_out
    eps = 1e-5
    mean = jnp.mean(y, axis=-1, keepdims=True)
    var = jnp.mean((y - mean) ** 2, axis=-1, keepdims=True)
    return (y - mean) * jax.lax.rsqrt(var + eps) * g


if __name__ == "__main__":
    # Small deterministic config.
    B, N, DIM = 2, 8, 32
    HEADS, DIM_HEAD = 4, 8
    INNER = HEADS * DIM_HEAD

    key = jax.random.PRNGKey(0)
    kx, kqkv, kout, _ = jax.random.split(key, 4)

    x = jax.random.normal(kx, (B, N, DIM), dtype=jnp.float32)
    w_qkv = jax.random.normal(kqkv, (DIM, 3 * INNER), dtype=jnp.float32) * 0.05
    w_out = jax.random.normal(kout, (INNER, DIM), dtype=jnp.float32) * 0.05
    g = jnp.ones((DIM,), dtype=jnp.float32)          # LayerNorm gain init = ones

    y_ref = _reference(x, w_qkv, w_out, g, heads=HEADS, dim_head=DIM_HEAD)

    # Exact-parity path: float32 matmul operands everywhere (matches the
    # PyTorch float32 forward semantics).
    y_f32 = attention_forward(x, w_qkv, w_out, g, heads=HEADS, dim_head=DIM_HEAD,
                              compute_dtype=jnp.float32)
    y_f32 = jax.block_until_ready(y_f32)
    assert jnp.allclose(y_f32, y_ref, atol=2e-3, rtol=2e-3), \
        "f32 path mismatch vs reference"

    # Default fast path: bf16 matmul operands, f32 accumulation / softmax / LN.
    y_bf16 = attention_forward(x, w_qkv, w_out, g, heads=HEADS, dim_head=DIM_HEAD)
    y_bf16 = jax.block_until_ready(y_bf16)
    assert jnp.allclose(y_bf16, y_ref, atol=1e-1, rtol=1e-1), \
        "bf16 path diverged"

    print("KERNEL_OK")
</pallas_src>

<mosaic_0001>
module attributes {stable_mosaic.version = 11 : i64} {
  func.func @_qkv_proj_kernel(%arg0: i32, %arg1: i32, %arg2: memref<1x8x32xf32, #tpu.memory_space<vmem>>, %arg3: memref<32x96xf32, #tpu.memory_space<vmem>>, %arg4: memref<1x8x32xf32, #tpu.memory_space<vmem>>, %arg5: memref<1x8x32xf32, #tpu.memory_space<vmem>>, %arg6: memref<1x8x32xf32, #tpu.memory_space<vmem>>) attributes {dimension_semantics = [#tpu.dimension_semantics<parallel>, #tpu.dimension_semantics<parallel>], iteration_bounds = array<i64: 2, 1>, scalar_prefetch = 0 : i64, scratch_operands = 0 : i64, tpu.core_type = #tpu.core_type<tc>, window_params = [{transform_indices = @transform_0, window_bounds = array<i64: 1, 8, 32>}, {pipeline_mode = #tpu.pipeline_mode<synchronous>, transform_indices = @transform_1, window_bounds = array<i64: 32, 96>}, {transform_indices = @transform_2, window_bounds = array<i64: 1, 8, 32>}, {transform_indices = @transform_3, window_bounds = array<i64: 1, 8, 32>}, {transform_indices = @transform_4, window_bounds = array<i64: 1, 8, 32>}]} {
    %c0 = arith.constant 0 : index
    %c0_0 = arith.constant 0 : index
    %c0_1 = arith.constant 0 : index
    %0 = vector.load %arg2[%c0, %c0_0, %c0_1] : memref<1x8x32xf32, #tpu.memory_space<vmem>>, vector<1x8x32xf32>
    %1 = vector.shape_cast %0 : vector<1x8x32xf32> to vector<8x32xf32>
    %c0_2 = arith.constant 0 : index
    %c0_3 = arith.constant 0 : index
    %2 = vector.load %arg3[%c0_2, %c0_3] : memref<32x96xf32, #tpu.memory_space<vmem>>, vector<32x96xf32>
    %cst = arith.constant dense<0.000000e+00> : vector<8x96xf32>
    %3 = tpu.matmul %1, %2, %cst {dimension_numbers = #tpu.dot_dimension_numbers<[1], [0], [0], [1], [0, 0, 1, 1], [], []>} : vector<8x32xf32>, vector<32x96xf32>, vector<8x96xf32> -> vector<8x96xf32>
    %4 = vector.extract_strided_slice %3 {offsets = [0, 0], sizes = [8, 32], strides = [1, 1]} : vector<8x96xf32> to vector<8x32xf32>
    %c0_4 = arith.constant 0 : index
    %c0_5 = arith.constant 0 : index
    %c0_6 = arith.constant 0 : index
    %5 = vector.load %arg4[%c0_4, %c0_5, %c0_6] : memref<1x8x32xf32, #tpu.memory_space<vmem>>, vector<1x8x32xf32>
    %6 = vector.shape_cast %5 : vector<1x8x32xf32> to vector<8x32xf32>
    %7 = vector.shape_cast %4 : vector<8x32xf32> to vector<1x8x32xf32>
    tpu.vector_store %arg4[%c0_4, %c0_5, %c0_6], %7 {strides = array<i32>} : memref<1x8x32xf32, #tpu.memory_space<vmem>>, vector<1x8x32xf32>,
    %8 = vector.extract_strided_slice %3 {offsets = [0, 32], sizes = [8, 32], strides = [1, 1]} : vector<8x96xf32> to vector<8x32xf32>
    %c0_7 = arith.constant 0 : index
    %c0_8 = arith.constant 0 : index
    %c0_9 = arith.constant 0 : index
    %9 = vector.load %arg5[%c0_7, %c0_8, %c0_9] : memref<1x8x32xf32, #tpu.memory_space<vmem>>, vector<1x8x32xf32>
    %10 = vector.shape_cast %9 : vector<1x8x32xf32> to vector<8x32xf32>
    %11 = vector.shape_cast %8 : vector<8x32xf32> to vector<1x8x32xf32>
    tpu.vector_store %arg5[%c0_7, %c0_8, %c0_9], %11 {strides = array<i32>} : memref<1x8x32xf32, #tpu.memory_space<vmem>>, vector<1x8x32xf32>,
    %12 = vector.extract_strided_slice %3 {offsets = [0, 64], sizes = [8, 32], strides = [1, 1]} : vector<8x96xf32> to vector<8x32xf32>
    %c0_10 = arith.constant 0 : index
    %c0_11 = arith.constant 0 : index
    %c0_12 = arith.constant 0 : index
    %13 = vector.load %arg6[%c0_10, %c0_11, %c0_12] : memref<1x8x32xf32, #tpu.memory_space<vmem>>, vector<1x8x32xf32>
    %14 = vector.shape_cast %13 : vector<1x8x32xf32> to vector<8x32xf32>
    %15 = vector.shape_cast %12 : vector<8x32xf32> to vector<1x8x32xf32>
    tpu.vector_store %arg6[%c0_10, %c0_11, %c0_12], %15 {strides = array<i32>} : memref<1x8x32xf32, #tpu.memory_space<vmem>>, vector<1x8x32xf32>,
    return
  }
  func.func @transform_0(%arg0: i32, %arg1: i32) -> (i32, i32, i32) {
    %c0_i32 = arith.constant 0 : i32
    %c0_i32_0 = arith.constant 0 : i32
    return %arg0, %arg1, %c0_i32 : i32, i32, i32
  }
  func.func @transform_1(%arg0: i32, %arg1: i32) -> (i32, i32) {
    %c0_i32 = arith.constant 0 : i32
    %c0_i32_0 = arith.constant 0 : i32
    %c0_i32_1 = arith.constant 0 : i32
    return %c0_i32, %c0_i32_0 : i32, i32
  }
  func.func @transform_2(%arg0: i32, %arg1: i32) -> (i32, i32, i32) {
    %c0_i32 = arith.constant 0 : i32
    %c0_i32_0 = arith.constant 0 : i32
    return %arg0, %arg1, %c0_i32 : i32, i32, i32
  }
  func.func @transform_3(%arg0: i32, %arg1: i32) -> (i32, i32, i32) {
    %c0_i32 = arith.constant 0 : i32
    %c0_i32_0 = arith.constant 0 : i32
    return %arg0, %arg1, %c0_i32 : i32, i32, i32
  }
  func.func @transform_4(%arg0: i32, %arg1: i32) -> (i32, i32, i32) {
    %c0_i32 = arith.constant 0 : i32
    %c0_i32_0 = arith.constant 0 : i32
    return %arg0, %arg1, %c0_i32 : i32, i32, i32
  }
}

</mosaic_0001>

<llo_original>
// kernel: tpu_custom_call.1
$region0: #{tpu_custom_call.1}
  #allocation0 [shape = 'u32[]', space=smem, size = 0x4, offset = 0x4, fixed_abs, tag = 'smem constant byte address 0x4 - core index']
  #allocation1 [shape = 'u32[144,128]{1,0:T(1,128)}', space=vmem, size = 0x12000, scoped, tag = 'internal scratch']
  %s0 = inlined_call_operand.hbm [shape: f32[2,8,32], index: 0, kind: input, shape index: {}]
  %s1 = inlined_call_operand.hbm [shape: f32[32,96], index: 1, kind: input, shape index: {}]
  %s2 = inlined_call_operand.hbm [shape: f32[2,8,32], index: 2, kind: output, shape index: {0}]
  %s3 = inlined_call_operand.hbm [shape: f32[2,8,32], index: 3, kind: output, shape index: {1}]
  %s4 = inlined_call_operand.hbm [shape: f32[2,8,32], index: 4, kind: output, shape index: {2}]
  %5 = xla_tuple %s2, %s3, %s4
  %s6 = sld [smem:[#allocation0]]
  $region65: #{tpu_custom_call.1} parent=0
    _
  %s8 = ssub.s32 1, %s6
  %s9 = scalar_select 0, %s8, %s6
  $region1: #{tpu_custom_call.1} parent=0
    #allocation2 [shape = 'u8[8192]{0}', space=vmem, size = 0x2000, scoped, tag = 'input window, operand 0']
    #allocation3 [shape = 's32[2]{0}', space=sflag, size = 0x8, scoped, tag = 'scoped memory for tpu_custom_call.1']
    #allocation4 [shape = 's32[2]{0}', space=sflag, size = 0x8, scoped, tag = 'scoped memory for tpu_custom_call.1']
    #allocation5 [shape = 'u8[16384]{0}', space=vmem, size = 0x4000, scoped, tag = 'input window, operand 1, single buffered']
    #allocation6 [shape = 's32[1]{0}', space=sflag, size = 0x4, scoped, tag = 'scoped memory for tpu_custom_call.1']
    #allocation7 [shape = 'u8[8192]{0}', space=vmem, size = 0x2000, scoped, tag = 'output window, operand 0']
    #allocation8 [shape = 'u8[8192]{0}', space=vmem, size = 0x2000, scoped, tag = 'output window, operand 1']
    #allocation9 [shape = 's32[2]{0}', space=sflag, size = 0x8, scoped, tag = 'scoped memory for tpu_custom_call.1']
    #allocation10 [shape = 'u8[8192]{0}', space=vmem, size = 0x2000, scoped, tag = 'output window, operand 2']
    %10 = vsyncpa [#allocation3], 0
    %s11 = scalar_lea.sflag [#allocation3], 1
    %12 = vsyncpa %s11, 0
    %13 = vsyncpa [#allocation6], 0
    %14 = vsyncpa [#allocation4], 0
    %s15 = scalar_lea.sflag [#allocation4], 1
    %16 = vsyncpa %s15, 0
    %17 = vsyncpa [#allocation9], 0
    %s18 = scalar_lea.sflag [#allocation9], 1
    %19 = vsyncpa %s18, 0
    loop: start=0, step=1, limit=4
    $region2: #{tpu_custom_call.1} parent=1 // loop_pre_header
      _
    $region3: #{tpu_custom_call.1} parent=1 // loop_header
      %s21 = sphi 0, %s25
      %p22 = scmp.ge.s32.totalorder %s21, 4
      %s28 = sphi 0, %s40
      %s29 = sphi 0, %s36
      %s30 = sphi 0, %s28
      %s31 = sphi 0, %s29
      %s32 = sphi 0, %s30
      %s33 = sphi 0, %s31
      %s45 = sphi 0, %s47
      %s48 = sphi 0, %s45
      %s49 = sphi 0, %s48
      %s65 = sphi 0, %s49
      %s69 = sphi 0, %s69
      %s71 = sphi 0, %s69
      %s72 = sphi 0, %s71
      %s86 = sphi 0, %s72
      %s94 = sphi 0, %s96
      %s97 = sphi 0, %s94
      %s98 = sphi 0, %s97
      %s114 = sphi 0, %s98
      %s122 = sphi 0, %s124
      %s125 = sphi 0, %s122
      %s126 = sphi 0, %s125
      %s142 = sphi 0, %s126
      %s150 = sphi 0, %s152
      %s153 = sphi 0, %s150
      %s154 = sphi 0, %s153
      %s170 = sphi 0, %s154
    $region4: #{tpu_custom_call.1} parent=1 // loop_header_branch
      %24 = sbr.rel (%p22) target = $region8
    $region5: #{tpu_custom_call.1} parent=1 // loop_body
      %s26 = ssub.s32 %s21, 1
      %s27 = ssub.s32 %s21, 2
      %s34 = sadd.s32 1, %s29
      %p35 = scmp.ge.s32.totalorder %s34, 1
      %s36 = scalar_select %p35, 0, %s34
      %s37 = sadd.s32 1, %s28
      %s38 = scalar_select %p35, %s37, %s28
      %p39 = scmp.ge.s32.totalorder %s38, 2
      %s40 = scalar_select %p39, 0, %s38
      %s41 = ssub.s32 %s28, %s40
      %s42 = ssub.s32 %s29, %s36
      %s43 = sor.u32 %s41, %s42
      %p44 = scmp.eq.s32.totalorder %s43, 0
      %s46 = sadd.s32 %s45, 1
      %s47 = scalar_select %p44, %s45, %s46
      %p50 = pneg %p44
      %p51 = scmp.eq.s32.totalorder %s21, 1
      %p52 = por %p50, %p51
      %p53 = scmp.ne.s32.totalorder %s45, %s48
      %p54 = scmp.eq.s32.totalorder %s21, 0
      %p55 = por %p53, %p54
      %p56 = scmp.ne.s32.totalorder %s45, %s48
      %p57 = scmp.eq.s32.totalorder %s26, 1
      %p58 = por %p56, %p57
      %p59 = scmp.ne.s32.totalorder %s48, %s49
      %p60 = scmp.eq.s32.totalorder %s26, 0
      %p61 = por %p59, %p60
      %p62 = scmp.ne.s32.totalorder %s48, %s49
      %p63 = scmp.eq.s32.totalorder %s27, 1
      %p64 = por %p62, %p63
      %p66 = scmp.ne.s32.totalorder %s49, %s65
      %p67 = scmp.eq.s32.totalorder %s27, 0
      %p68 = por %p66, %p67
      %s70 = sadd.s32 %s69, 1
      %p73 = scmp.eq.s32.totalorder %s21, 1
      %p74 = scmp.ne.s32.totalorder %s69, %s71
      %p75 = scmp.eq.s32.totalorder %s21, 0
      %p76 = por %p74, %p75
      %p77 = scmp.ne.s32.totalorder %s69, %s71
      %p78 = scmp.eq.s32.totalorder %s26, 1
      %p79 = por %p77, %p78
      %p80 = scmp.ne.s32.totalorder %s71, %s72
      %p81 = scmp.eq.s32.totalorder %s26, 0
      %p82 = por %p80, %p81
      %p83 = scmp.ne.s32.totalorder %s71, %s72
      %p84 = scmp.eq.s32.totalorder %s27, 1
      %p85 = por %p83, %p84
      %p87 = scmp.ne.s32.totalorder %s72, %s86
      %p88 = scmp.eq.s32.totalorder %s27, 0
      %p89 = por %p87, %p88
      %s90 = ssub.s32 %s28, %s40
      %s91 = ssub.s32 %s29, %s36
      %s92 = sor.u32 %s90, %s91
      %p93 = scmp.eq.s32.totalorder %s92, 0
      %s95 = sadd.s32 %s94, 1
      %s96 = scalar_select %p93, %s94, %s95
      %p99 = pneg %p93
      %p100 = scmp.eq.s32.totalorder %s21, 1
      %p101 = por %p99, %p100
      %p102 = scmp.ne.s32.totalorder %s94, %s97
      %p103 = scmp.eq.s32.totalorder %s21, 0
      %p104 = por %p102, %p103
      %p105 = scmp.ne.s32.totalorder %s94, %s97
      %p106 = scmp.eq.s32.totalorder %s26, 1
      %p107 = por %p105, %p106
      %p108 = scmp.ne.s32.totalorder %s97, %s98
      %p109 = scmp.eq.s32.totalorder %s26, 0
      %p110 = por %p108, %p109
      %p111 = scmp.ne.s32.totalorder %s97, %s98
      %p112 = scmp.eq.s32.totalorder %s27, 1
      %p113 = por %p111, %p112
      %p115 = scmp.ne.s32.totalorder %s98, %s114
      %p116 = scmp.eq.s32.totalorder %s27, 0
      %p117 = por %p115, %p116
      %s118 = ssub.s32 %s28, %s40
      %s119 = ssub.s32 %s29, %s36
      %s120 = sor.u32 %s118, %s119
      %p121 = scmp.eq.s32.totalorder %s120, 0
      %s123 = sadd.s32 %s122, 1
      %s124 = scalar_select %p121, %s122, %s123
      %p127 = pneg %p121
      %p128 = scmp.eq.s32.totalorder %s21, 1
      %p129 = por %p127, %p128
      %p130 = scmp.ne.s32.totalorder %s122, %s125
      %p131 = scmp.eq.s32.totalorder %s21, 0
      %p132 = por %p130, %p131
      %p133 = scmp.ne.s32.totalorder %s122, %s125
      %p134 = scmp.eq.s32.totalorder %s26, 1
      %p135 = por %p133, %p134
      %p136 = scmp.ne.s32.totalorder %s125, %s126
      %p137 = scmp.eq.s32.totalorder %s26, 0
      %p138 = por %p136, %p137
      %p139 = scmp.ne.s32.totalorder %s125, %s126
      %p140 = scmp.eq.s32.totalorder %s27, 1
      %p141 = por %p139, %p140
      %p143 = scmp.ne.s32.totalorder %s126, %s142
      %p144 = scmp.eq.s32.totalorder %s27, 0
      %p145 = por %p143, %p144
      %s146 = ssub.s32 %s28, %s40
      %s147 = ssub.s32 %s29, %s36
      %s148 = sor.u32 %s146, %s147
      %p149 = scmp.eq.s32.totalorder %s148, 0
      %s151 = sadd.s32 %s150, 1
      %s152 = scalar_select %p149, %s150, %s151
      %p155 = pneg %p149
      %p156 = scmp.eq.s32.totalorder %s21, 1
      %p157 = por %p155, %p156
      %p158 = scmp.ne.s32.totalorder %s150, %s153
      %p159 = scmp.eq.s32.totalorder %s21, 0
      %p160 = por %p158, %p159
      %p161 = scmp.ne.s32.totalorder %s150, %s153
      %p162 = scmp.eq.s32.totalorder %s26, 1
      %p163 = por %p161, %p162
      %p164 = scmp.ne.s32.totalorder %s153, %s154
      %p165 = scmp.eq.s32.totalorder %s26, 0
      %p166 = por %p164, %p165
      %p167 = scmp.ne.s32.totalorder %s153, %s154
      %p168 = scmp.eq.s32.totalorder %s27, 1
      %p169 = por %p167, %p168
      %p171 = scmp.ne.s32.totalorder %s154, %s170
      %p172 = scmp.eq.s32.totalorder %s27, 0
      %p173 = por %p171, %p172
      %p174 = scmp.le.s32.totalorder 1, %s21
      %p175 = scmp.lt.s32.totalorder %s21, 3
      %p176 = pnand %p174, %p175
      %p177 = pneg %p176
      // Predicated region
      $region9: #{tpu_custom_call.1} parent=5 // pred_check
        _
      $region10: #{tpu_custom_call.1} parent=5 // pred_check_branch
        %179 = sbr.rel (%p176) target = $region12
      $region11: #{tpu_custom_call.1} parent=5 // pred_region
        %s180 = ssub.s32 %s21, 1
        // Predicated region
        $region13: #{tpu_custom_call.1} parent=11 // pred_check
          %p181 = pneg %p82
        $region14: #{tpu_custom_call.1} parent=11 // pred_check_branch
          %183 = sbr.rel (%p181) target = $region16
        $region15: #{tpu_custom_call.1} parent=11 // pred_region
          %s185 = ssub.s32 512, 512
          %186 = vsyncadd [#allocation6], %s185
          %s187 = sshll.u32 [#allocation5], 4
          %s188 = int_to_ptr.vmem [resolvable:$true] %s187
          %193 = dma.hbm_to_vmem [thread:$0]  %s1, 512, %s188, [#allocation6], 128, 128, 8
        $region16: #{tpu_custom_call.1} parent=11 // pred_fallthru
          _
      $region12: #{tpu_custom_call.1} parent=5 // pred_fallthru
        _
      %p194 = scmp.lt.s32.totalorder %s21, 2
      // Predicated region
      $region17: #{tpu_custom_call.1} parent=5 // pred_check
        %p195 = pneg %p194
      $region18: #{tpu_custom_call.1} parent=5 // pred_check_branch
        %197 = sbr.rel (%p195) target = $region20
      $region19: #{tpu_custom_call.1} parent=5 // pred_region
        // Predicated region
        $region21: #{tpu_custom_call.1} parent=19 // pred_check
          %p198 = pneg %p55
        $region22: #{tpu_custom_call.1} parent=19 // pred_check_branch
          %200 = sbr.rel (%p198) target = $region24
        $region23: #{tpu_custom_call.1} parent=19 // pred_region
          %s201 = sand.u32 %s45, 1
          %s202 = scalar_lea.sflag [#allocation3], %s201
          %s203 = sand.u32 %s45, 1
          %s204 = smul.addr %s203, 8
          %s205 = scalar_lea.vmem [#allocation2], %s204
          %s207 = ssub.s32 128, 128
          %208 = vsyncadd %s202, %s207
          %s209 = sadd.s32 %s29, %s28
          %s210 = smul.addr %s209, 128
          %s211 = scalar_lea.hbm %s0, %s210
          %s213 = sshll.u32 %s205, 4
          %s214 = int_to_ptr.vmem [resolvable:$true] %s213
          %216 = dma.hbm_to_vmem [thread:$0]  %s211, 128, %s214, %s202
        $region24: #{tpu_custom_call.1} parent=19 // pred_fallthru
          _
      $region20: #{tpu_custom_call.1} parent=5 // pred_fallthru
        _
      %p217 = scmp.le.s32.totalorder 1, %s21
      %p218 = scmp.lt.s32.totalorder %s21, 3
      %p219 = pnand %p217, %p218
      %p220 = pneg %p219
      // Predicated region
      $region25: #{tpu_custom_call.1} parent=5 // pred_check
        _
      $region26: #{tpu_custom_call.1} parent=5 // pred_check_branch
        %222 = sbr.rel (%p219) target = $region28
      $region27: #{tpu_custom_call.1} parent=5 // pred_region
        %s223 = ssub.s32 %s21, 1
        %s224 = sand.u32 %s48, 1
        %s225 = scalar_lea.sflag [#allocation3], %s224
        %s226 = sand.u32 %s48, 1
        %s227 = smul.addr %s226, 8
        %s228 = scalar_lea.vmem [#allocation2], %s227
        // Predicated region
        $region29: #{tpu_custom_call.1} parent=27 // pred_check
          %p229 = pneg %p61
        $region30: #{tpu_custom_call.1} parent=27 // pred_check_branch
          %231 = sbr.rel (%p229) target = $region32
        $region31: #{tpu_custom_call.1} parent=27 // pred_region
          %232 = dma.done %s225, 128
        $region32: #{tpu_custom_call.1} parent=27 // pred_fallthru
          _
        // Predicated region
        $region33: #{tpu_custom_call.1} parent=27 // pred_check
          %p233 = pneg %p82
        $region34: #{tpu_custom_call.1} parent=27 // pred_check_branch
          %235 = sbr.rel (%p233) target = $region36
        $region35: #{tpu_custom_call.1} parent=27 // pred_region
          %236 = dma.done [#allocation6], 512
        $region36: #{tpu_custom_call.1} parent=27 // pred_fallthru
          _
        %s237 = sand.u32 %s48, 1
        %s238 = scalar_lea.sflag [#allocation3], %s237
        %s239 = sand.u32 %s48, 1
        %s240 = smul.addr %s239, 8
        %s241 = scalar_lea.vmem [#allocation2], %s240
        %p242 = pneg %p61
        %p243 = pneg %p58
        %p244 = pneg %p82
        %p245 = pneg %p79
        %p246 = pneg %p110
        %p247 = pneg %p107
        %s248 = sand.u32 %s97, 1
        %s249 = scalar_lea.sflag [#allocation4], %s248
        %s250 = sand.u32 %s97, 1
        %s251 = smul.addr %s250, 8
        %s252 = scalar_lea.vmem [#allocation7], %s251
        %p253 = pneg %p138
        %p254 = pneg %p135
        %s255 = sand.u32 %s26, 1
        %s256 = scalar_lea.sflag [#allocation9], %s255
        %s257 = sand.u32 %s125, 1
        %s258 = smul.addr %s257, 8
        %s259 = scalar_lea.vmem [#allocation8], %s258
        %p260 = pneg %p166
        %p261 = pneg %p163
        %s262 = sand.u32 %s26, 1
        %s263 = scalar_lea.sflag [#allocation9], %s262
        %s264 = sand.u32 %s153, 1
        %s265 = smul.addr %s264, 8
        %s266 = scalar_lea.vmem [#allocation10], %s265
        %v267 = vld [vmem:[%s228] sm:$0xff]
        %v268 = vld [vmem:[#allocation5] sm:$0xff]
        %v269 = vld [vmem:[#allocation5 + $0x8] sm:$0xff]
        %v270 = vld [vmem:[#allocation5 + $0x10] sm:$0xff]
        %v271 = vld [vmem:[#allocation5 + $0x18] sm:$0xff]
        %vm272 = vcmask 261120
        %v274 = vsel %vm272, %v267, 0
        %276 = vmatprep.subr.mxu0 0.0
        %277 = vmatpush1.msra.mxu0 %v268
        %278 = vmatprep.subr.mxu0 0.0
        %279 = vmatpush1.msra.mxu0 %v269
        %280 = vmatprep.subr.mxu0 0.0
        %281 = vmatpush1.msra.mxu0 %v270
        %282 = vmatprep.subr.mxu0 0.0
        %283 = vmatpush1.msra.mxu0 %v271
        %284 = vmatprep.subr.mxu0 0.0
        %285 = vmatpush1.msra.mxu0 0.0
        %286 = vmatprep.subr.mxu0 0.0
        %287 = vmatpush1.msra.mxu0 0.0
        %288 = vmatprep.subr.mxu0 0.0
        %289 = vmatpush1.msra.mxu0 0.0
        %290 = vmatprep.subr.mxu0 0.0
        %291 = vmatpush1.msra.mxu0 0.0
        %292 = vmatprep.subr.mxu0 0.0
        %293 = vmatpush1.msra.mxu0 0.0
        %294 = vmatprep.subr.mxu0 0.0
        %295 = vmatpush1.msra.mxu0 0.0
        %296 = vmatprep.subr.mxu0 0.0
        %297 = vmatpush1.msra.mxu0 0.0
        %298 = vmatprep.subr.mxu0 0.0
        %299 = vmatpush1.msra.mxu0 0.0
        %300 = vmatprep.subr.mxu0 0.0
        %301 = vmatpush1.msra.mxu0 0.0
        %302 = vmatprep.subr.mxu0 0.0
        %303 = vmatpush1.msra.mxu0 0.0
        %304 = vmatprep.subr.mxu0 0.0
        %305 = vmatpush1.msra.mxu0 0.0
        %306 = vmatprep.subr.mxu0 0.0
        %307 = vmatpush1.msra.mxu0 0.0
        %308 = vmatprep.subr.mxu0 0.0
        %309 = vmatpush1.msra.mxu0 0.0
        %310 = vmatprep.subr.mxu0 0.0
        %311 = vmatpush1.msra.mxu0 0.0
        %312 = vmatprep.subr.mxu0 0.0
        %313 = vmatpush1.msra.mxu0 0.0
        %314 = vmatprep.subr.mxu0 0.0
        %315 = vmatpush1.msra.mxu0 0.0
        %316 = vmatprep.subr.mxu0 0.0
        %317 = vmatpush1.msra.mxu0 0.0
        %318 = vmatprep.subr.mxu0 0.0
        %319 = vmatpush1.msra.mxu0 0.0
        %320 = vmatprep.subr.mxu0 0.0
        %321 = vmatpush1.msra.mxu0 0.0
        %322 = vmatprep.subr.mxu0 0.0
        %323 = vmatpush1.msra.mxu0 0.0
        %324 = vmatprep.subr.mxu0 0.0
        %325 = vmatpush1.msra.mxu0 0.0
        %326 = vmatprep.subr.mxu0 0.0
        %327 = vmatpush1.msra.mxu0 0.0
        %328 = vmatprep.subr.mxu0 0.0
        %329 = vmatpush1.msra.mxu0 0.0
        %330 = vmatprep.subr.mxu0 0.0
        %331 = vmatpush1.msra.mxu0 0.0
        %332 = vmatprep.subr.mxu0 0.0
        %333 = vmatpush1.msra.mxu0 0.0
        %334 = vmatprep.subr.mxu0 0.0
        %335 = vmatpush1.msra.mxu0 0.0
        %336 = vmatprep.subr.mxu0 0.0
        %337 = vmatpush1.msra.mxu0 0.0
        %338 = vmatprep.subr.mxu0 0.0
        %339 = vmatpush1.msra.mxu0 0.0
        %340 = vmatprep.mubr.f32.mxu0 0.0
        %341 = vmatmul.mubr.f32.gmra.mrb[0].mxu0 %v274
        %v342 = vpop.f32.mrb[0].mxu0
        %v343 = vadd.f32 0.0, %v342
        %v344 = vpop.f32.mrb[0].mxu0
        %345 = vdwg.mxu0
        %346 = vst.msk [vmem:[%s252] sm:$0xff] %vm272, %v343
        %348 = vrot.lane.b32.xlu0 %v343, 96
        %v349 = vpop.permute.xlu0 %348
        %351 = vst.msk [vmem:[%s259] sm:$0xff] %vm272, %v349
        %352 = vrot.lane.b32.xlu0 %v343, 64
        %v353 = vpop.permute.xlu0 %352
        %355 = vst.msk [vmem:[%s266] sm:$0xff] %vm272, %v353
        %s356 = sand.u32 %s97, 1
        %s357 = scalar_lea.sflag [#allocation4], %s356
        %s358 = sand.u32 %s97, 1
        %s359 = smul.addr %s358, 8
        %s360 = scalar_lea.vmem [#allocation7], %s359
        %s361 = sand.u32 %s26, 1
        %s362 = scalar_lea.sflag [#allocation9], %s361
        %s363 = sand.u32 %s125, 1
        %s364 = smul.addr %s363, 8
        %s365 = scalar_lea.vmem [#allocation8], %s364
        %s366 = sand.u32 %s26, 1
        %s367 = scalar_lea.sflag [#allocation9], %s366
        %s368 = sand.u32 %s153, 1
        %s369 = smul.addr %s368, 8
        %s370 = scalar_lea.vmem [#allocation10], %s369
        // Predicated region
        $region37: #{tpu_custom_call.1} parent=27 // pred_check
          %p371 = pneg %p107
        $region38: #{tpu_custom_call.1} parent=27 // pred_check_branch
          %373 = sbr.rel (%p371) target = $region40
        $region39: #{tpu_custom_call.1} parent=27 // pred_region
          %s375 = ssub.s32 128, 128
          %376 = vsyncadd %s357, %s375
          %s377 = sadd.s32 %s31, %s30
          %s378 = smul.addr %s377, 128
          %s379 = scalar_lea.hbm %s2, %s378
          %s381 = sshll.u32 %s360, 4
          %s382 = int_to_ptr.vmem [resolvable:$true] %s381
          %384 = dma.vmem_to_hbm [thread:$0]  %s382, 128, %s379, %s357
        $region40: #{tpu_custom_call.1} parent=27 // pred_fallthru
          _
        // Predicated region
        $region41: #{tpu_custom_call.1} parent=27 // pred_check
          %p385 = pneg %p135
        $region42: #{tpu_custom_call.1} parent=27 // pred_check_branch
          %387 = sbr.rel (%p385) target = $region44
        $region43: #{tpu_custom_call.1} parent=27 // pred_region
          %s389 = ssub.s32 128, 128
          %390 = vsyncadd %s362, %s389
          %s391 = sadd.s32 %s31, %s30
          %s392 = smul.addr %s391, 128
          %s393 = scalar_lea.hbm %s3, %s392
          %s395 = sshll.u32 %s365, 4
          %s396 = int_to_ptr.vmem [resolvable:$true] %s395
          %398 = dma.vmem_to_hbm [thread:$0]  %s396, 128, %s393, %s362
        $region44: #{tpu_custom_call.1} parent=27 // pred_fallthru
          _
        // Predicated region
        $region45: #{tpu_custom_call.1} parent=27 // pred_check
          %p399 = pneg %p163
        $region46: #{tpu_custom_call.1} parent=27 // pred_check_branch
          %401 = sbr.rel (%p399) target = $region48
        $region47: #{tpu_custom_call.1} parent=27 // pred_region
          %s403 = ssub.s32 128, 128
          %404 = vsyncadd %s367, %s403
          %s405 = sadd.s32 %s31, %s30
          %s406 = smul.addr %s405, 128
          %s407 = scalar_lea.hbm %s4, %s406
          %s409 = sshll.u32 %s370, 4
          %s410 = int_to_ptr.vmem [resolvable:$true] %s409
          %412 = dma.vmem_to_hbm [thread:$0]  %s410, 128, %s407, %s367
        $region48: #{tpu_custom_call.1} parent=27 // pred_fallthru
          _
      $region28: #{tpu_custom_call.1} parent=5 // pred_fallthru
        _
      %p413 = scmp.le.s32.totalorder 2, %s21
      // Predicated region
      $region49: #{tpu_custom_call.1} parent=5 // pred_check
        %p414 = pneg %p413
      $region50: #{tpu_custom_call.1} parent=5 // pred_check_branch
        %416 = sbr.rel (%p414) target = $region52
      $region51: #{tpu_custom_call.1} parent=5 // pred_region
        %s417 = ssub.s32 %s21, 2
        // Predicated region
        $region53: #{tpu_custom_call.1} parent=51 // pred_check
          %p418 = pneg %p113
        $region54: #{tpu_custom_call.1} parent=51 // pred_check_branch
          %420 = sbr.rel (%p418) target = $region56
        $region55: #{tpu_custom_call.1} parent=51 // pred_region
          %s421 = sand.u32 %s98, 1
          %s422 = scalar_lea.sflag [#allocation4], %s421
          %s423 = sand.u32 %s98, 1
          %s424 = smul.addr %s423, 8
          %s425 = scalar_lea.vmem [#allocation7], %s424
          %426 = dma.done %s422, 128
        $region56: #{tpu_custom_call.1} parent=51 // pred_fallthru
          _
        // Predicated region
        $region57: #{tpu_custom_call.1} parent=51 // pred_check
          %p427 = pneg %p141
        $region58: #{tpu_custom_call.1} parent=51 // pred_check_branch
          %429 = sbr.rel (%p427) target = $region60
        $region59: #{tpu_custom_call.1} parent=51 // pred_region
          %s430 = sand.u32 %s27, 1
          %s431 = scalar_lea.sflag [#allocation9], %s430
          %s432 = sand.u32 %s126, 1
          %s433 = smul.addr %s432, 8
          %s434 = scalar_lea.vmem [#allocation8], %s433
          %435 = dma.done %s431, 128
        $region60: #{tpu_custom_call.1} parent=51 // pred_fallthru
          _
        // Predicated region
        $region61: #{tpu_custom_call.1} parent=51 // pred_check
          %p436 = pneg %p169
        $region62: #{tpu_custom_call.1} parent=51 // pred_check_branch
          %438 = sbr.rel (%p436) target = $region64
        $region63: #{tpu_custom_call.1} parent=51 // pred_region
          %s439 = sand.u32 %s27, 1
          %s440 = scalar_lea.sflag [#allocation9], %s439
          %s441 = sand.u32 %s154, 1
          %s442 = smul.addr %s441, 8
          %s443 = scalar_lea.vmem [#allocation10], %s442
          %444 = dma.done %s440, 128
        $region64: #{tpu_custom_call.1} parent=51 // pred_fallthru
          _
      $region52: #{tpu_custom_call.1} parent=5 // pred_fallthru
        _
    $region6: #{tpu_custom_call.1} parent=1 // loop_footer
      %s25 = sadd.s32 1, %s21
    $region7: #{tpu_custom_call.1} parent=1 // loop_footer_branch
      %20 = sbr.rel target = $region3
    $region8: #{tpu_custom_call.1} parent=1 // loop_exit
      _
    %445 = vsyncpa [#allocation3], 1
    %s446 = scalar_lea.sflag [#allocation3], 1
    %447 = vsyncpa %s446, 1
    %448 = vsyncpa [#allocation6], 1
    %449 = vsyncpa [#allocation4], 1
    %s450 = scalar_lea.sflag [#allocation4], 1
    %451 = vsyncpa %s450, 1
    %452 = vsyncpa [#allocation9], 1
    %s453 = scalar_lea.sflag [#allocation9], 1
    %454 = vsyncpa %s453, 1

</llo_original>
